<compile_context>
chip_gen: v6e
topology: v6e:2x2x1
jax: 0.10.0
libtpu: 0.0.40
codegen_flags: <defaults>
</compile_context>

<pallas_src>
import functools

import jax
import jax.numpy as jnp
from jax.experimental import pallas as pl
from jax.experimental.pallas import tpu as pltpu


# ---------------------------------------------------------------------------
# Shared MLP block: three chained MXU matmuls with f32 accumulation.
# (The original module has no activations, so this is exactly the forward.)
# ---------------------------------------------------------------------------
def _mlp_block(x, w1, b1, w2, b2, w3, b3):
    h1 = jnp.dot(x, w1, preferred_element_type=jnp.float32) + b1
    h2 = jnp.dot(h1, w2, preferred_element_type=jnp.float32) + b2
    return jnp.dot(h2, w3, preferred_element_type=jnp.float32) + b3


# ---------------------------------------------------------------------------
# Kernel 1: logits only (batch-tiled, weights resident in VMEM).
# ---------------------------------------------------------------------------
def _logits_kernel(x_ref, w1_ref, b1_ref, w2_ref, b2_ref, w3_ref, b3_ref, o_ref):
    o_ref[...] = _mlp_block(
        x_ref[...], w1_ref[...], b1_ref[...], w2_ref[...], b2_ref[...],
        w3_ref[...], b3_ref[...],
    ).astype(o_ref.dtype)


# ---------------------------------------------------------------------------
# Kernel 2: fused MLP + mean softmax cross-entropy (nn.CrossEntropyLoss).
# ---------------------------------------------------------------------------
def _mlp_ce_kernel(x_ref, y_ref, w1_ref, b1_ref, w2_ref, b2_ref, w3_ref, b3_ref,
                   loss_ref, acc_ref, *, total_rows, tile_rows):
    i = pl.program_id(0)

    @pl.when(i == 0)
    def _init():
        acc_ref[0] = jnp.float32(0.0)

    logits = _mlp_block(
        x_ref[...], w1_ref[...], b1_ref[...], w2_ref[...], b2_ref[...],
        w3_ref[...], b3_ref[...],
    )
    tb, nc = logits.shape
    labels = y_ref[...]  # (tb, 1) int32

    # Per-row target logit via iota/compare mask (no one-hot in HBM or VMEM).
    class_ids = jax.lax.broadcasted_iota(jnp.int32, (tb, nc), 1)
    picked = jnp.sum(
        jnp.where(class_ids == labels, logits, 0.0), axis=-1, keepdims=True
    )

    # Numerically-stable logsumexp.
    m = jnp.max(logits, axis=-1, keepdims=True)
    lse = jnp.log(jnp.sum(jnp.exp(logits - m), axis=-1, keepdims=True)) + m
    nll = lse - picked  # (tb, 1)

    # Mask out padded rows of a ragged last batch tile.
    row_ids = i * tile_rows + jax.lax.broadcasted_iota(jnp.int32, (tb, 1), 0)
    nll = jnp.where(row_ids < total_rows, nll, 0.0)

    acc_ref[0] += jnp.sum(nll)

    @pl.when(i == pl.num_programs(0) - 1)
    def _finalize():
        loss_ref[0, 0] = acc_ref[0] * jnp.float32(1.0 / total_rows)


# ---------------------------------------------------------------------------
# Wrappers
# ---------------------------------------------------------------------------
def _batch_tile(batch):
    # Full batch in one tile while small; cap at 512 rows (multiple of 8) for
    # large batches so per-step DMAs stay near HBM roofline and VMEM stays low.
    return batch if batch <= 512 else 512


def _const_spec(arr):
    # Weights/biases: full-array block, same block every grid step -> resident.
    return pl.BlockSpec(arr.shape, lambda i: (0, 0))


def mlp_forward(x, params):
    w1, b1, w2, b2, w3, b3 = params
    batch, input_dim = x.shape
    num_classes = w3.shape[1]
    tb = _batch_tile(batch)
    grid = (pl.cdiv(batch, tb),)
    return pl.pallas_call(
        _logits_kernel,
        out_shape=jax.ShapeDtypeStruct((batch, num_classes), jnp.float32),
        grid=grid,
        in_specs=[
            pl.BlockSpec((tb, input_dim), lambda i: (i, 0)),
            _const_spec(w1), _const_spec(b1),
            _const_spec(w2), _const_spec(b2),
            _const_spec(w3), _const_spec(b3),
        ],
        out_specs=pl.BlockSpec((tb, num_classes), lambda i: (i, 0)),
        compiler_params=pltpu.CompilerParams(
            dimension_semantics=("parallel",)),  # independent batch tiles
    )(x, w1, b1, w2, b2, w3, b3)


def mlp_cross_entropy(x, labels, params):
    w1, b1, w2, b2, w3, b3 = params
    batch, input_dim = x.shape
    tb = _batch_tile(batch)
    grid = (pl.cdiv(batch, tb),)
    y2d = labels.astype(jnp.int32).reshape(batch, 1)

    kernel = functools.partial(_mlp_ce_kernel, total_rows=batch, tile_rows=tb)
    loss = pl.pallas_call(
        kernel,
        out_shape=jax.ShapeDtypeStruct((1, 1), jnp.float32),
        grid=grid,
        in_specs=[
            pl.BlockSpec((tb, input_dim), lambda i: (i, 0)),
            pl.BlockSpec((tb, 1), lambda i: (i, 0)),
            _const_spec(w1), _const_spec(b1),
            _const_spec(w2), _const_spec(b2),
            _const_spec(w3), _const_spec(b3),
        ],
        # Scalar loss lives in SMEM: no masked vector store of a 1x1 VMEM tile.
        out_specs=pl.BlockSpec((1, 1), lambda i: (0, 0),
                               memory_space=pltpu.SMEM),
        scratch_shapes=[pltpu.SMEM((1,), jnp.float32)],
        compiler_params=pltpu.CompilerParams(
            dimension_semantics=("arbitrary",)),  # batch axis is a reduction
    )(x, y2d, w1, b1, w2, b2, w3, b3)
    return loss[0, 0]


def multi_class_model_forward(x, params, y=None):
    """Module-equivalent: forward(x) -> logits, forward(x, y) -> mean CE loss."""
    if y is not None:
        return mlp_cross_entropy(x, y, params)
    return mlp_forward(x, params)


def init_params(key, input_dim, num_classes):
    k1, k2, k3, k4, k5, k6 = jax.random.split(key, 6)

    def uni(k, shape, fan_in):
        bound = 1.0 / jnp.sqrt(fan_in)
        return jax.random.uniform(k, shape, jnp.float32, -bound, bound)

    w1 = uni(k1, (input_dim, 20), input_dim)
    b1 = uni(k2, (1, 20), input_dim)
    w2 = uni(k3, (20, 10), 20)
    b2 = uni(k4, (1, 10), 20)
    w3 = uni(k5, (10, num_classes), 10)
    b3 = uni(k6, (1, num_classes), 10)
    return (w1, b1, w2, b2, w3, b3)


if __name__ == "__main__":
    key = jax.random.PRNGKey(0)
    kx, ky, kp = jax.random.split(key, 3)

    batch, input_dim, num_classes = 8, 32, 4
    x = jax.random.normal(kx, (batch, input_dim), dtype=jnp.float32)
    y = jax.random.randint(ky, (batch,), 0, num_classes, dtype=jnp.int32)
    params = init_params(kp, input_dim, num_classes)

    # Forward without labels -> logits
    logits = jax.block_until_ready(multi_class_model_forward(x, params))

    # Forward with labels -> scalar cross-entropy loss (single fused kernel)
    loss = jax.block_until_ready(multi_class_model_forward(x, params, y))

    # Sanity check against a pure-JAX reference
    w1, b1, w2, b2, w3, b3 = params
    ref_logits = ((x @ w1 + b1) @ w2 + b2) @ w3 + b3
    ref_loss = jnp.mean(
        jax.nn.logsumexp(ref_logits, axis=-1)
        - jnp.take_along_axis(ref_logits, y[:, None], axis=-1)[:, 0]
    )
    assert jnp.allclose(logits, ref_logits, atol=1e-5), "logits mismatch"
    assert jnp.allclose(loss, ref_loss, atol=1e-5), "loss mismatch"

    print("KERNEL_OK")
</pallas_src>

<mosaic_0001>
module attributes {stable_mosaic.version = 11 : i64} {
  func.func @_logits_kernel(%arg0: i32, %arg1: memref<8x32xf32, #tpu.memory_space<vmem>>, %arg2: memref<32x20xf32, #tpu.memory_space<vmem>>, %arg3: memref<1x20xf32, #tpu.memory_space<vmem>>, %arg4: memref<20x10xf32, #tpu.memory_space<vmem>>, %arg5: memref<1x10xf32, #tpu.memory_space<vmem>>, %arg6: memref<10x4xf32, #tpu.memory_space<vmem>>, %arg7: memref<1x4xf32, #tpu.memory_space<vmem>>, %arg8: memref<8x4xf32, #tpu.memory_space<vmem>>) attributes {dimension_semantics = [#tpu.dimension_semantics<parallel>], iteration_bounds = array<i64: 1>, scalar_prefetch = 0 : i64, scratch_operands = 0 : i64, tpu.core_type = #tpu.core_type<tc>, window_params = [{transform_indices = @transform_0, window_bounds = array<i64: 8, 32>}, {pipeline_mode = #tpu.pipeline_mode<synchronous>, transform_indices = @transform_1, window_bounds = array<i64: 32, 20>}, {pipeline_mode = #tpu.pipeline_mode<synchronous>, transform_indices = @transform_2, window_bounds = array<i64: 1, 20>}, {pipeline_mode = #tpu.pipeline_mode<synchronous>, transform_indices = @transform_3, window_bounds = array<i64: 20, 10>}, {pipeline_mode = #tpu.pipeline_mode<synchronous>, transform_indices = @transform_4, window_bounds = array<i64: 1, 10>}, {pipeline_mode = #tpu.pipeline_mode<synchronous>, transform_indices = @transform_5, window_bounds = array<i64: 10, 4>}, {pipeline_mode = #tpu.pipeline_mode<synchronous>, transform_indices = @transform_6, window_bounds = array<i64: 1, 4>}, {transform_indices = @transform_7, window_bounds = array<i64: 8, 4>}]} {
    %c0 = arith.constant 0 : index
    %c0_0 = arith.constant 0 : index
    %0 = vector.load %arg1[%c0, %c0_0] : memref<8x32xf32, #tpu.memory_space<vmem>>, vector<8x32xf32>
    %c0_1 = arith.constant 0 : index
    %c0_2 = arith.constant 0 : index
    %1 = vector.load %arg2[%c0_1, %c0_2] : memref<32x20xf32, #tpu.memory_space<vmem>>, vector<32x20xf32>
    %c0_3 = arith.constant 0 : index
    %c0_4 = arith.constant 0 : index
    %2 = vector.load %arg3[%c0_3, %c0_4] : memref<1x20xf32, #tpu.memory_space<vmem>>, vector<1x20xf32>
    %c0_5 = arith.constant 0 : index
    %c0_6 = arith.constant 0 : index
    %3 = vector.load %arg4[%c0_5, %c0_6] : memref<20x10xf32, #tpu.memory_space<vmem>>, vector<20x10xf32>
    %c0_7 = arith.constant 0 : index
    %c0_8 = arith.constant 0 : index
    %4 = vector.load %arg5[%c0_7, %c0_8] : memref<1x10xf32, #tpu.memory_space<vmem>>, vector<1x10xf32>
    %c0_9 = arith.constant 0 : index
    %c0_10 = arith.constant 0 : index
    %5 = vector.load %arg6[%c0_9, %c0_10] : memref<10x4xf32, #tpu.memory_space<vmem>>, vector<10x4xf32>
    %c0_11 = arith.constant 0 : index
    %c0_12 = arith.constant 0 : index
    %6 = vector.load %arg7[%c0_11, %c0_12] : memref<1x4xf32, #tpu.memory_space<vmem>>, vector<1x4xf32>
    %cst = arith.constant dense<0.000000e+00> : vector<8x20xf32>
    %7 = tpu.matmul %0, %1, %cst {dimension_numbers = #tpu.dot_dimension_numbers<[1], [0], [0], [1], [0, 0, 1, 1], [], []>} : vector<8x32xf32>, vector<32x20xf32>, vector<8x20xf32> -> vector<8x20xf32>
    %8 = vector.broadcast %2 : vector<1x20xf32> to vector<8x20xf32>
    %9 = arith.addf %7, %8 : vector<8x20xf32>
    %cst_13 = arith.constant dense<0.000000e+00> : vector<8x10xf32>
    %10 = tpu.matmul %9, %3, %cst_13 {dimension_numbers = #tpu.dot_dimension_numbers<[1], [0], [0], [1], [0, 0, 1, 1], [], []>} : vector<8x20xf32>, vector<20x10xf32>, vector<8x10xf32> -> vector<8x10xf32>
    %11 = vector.broadcast %4 : vector<1x10xf32> to vector<8x10xf32>
    %12 = arith.addf %10, %11 : vector<8x10xf32>
    %cst_14 = arith.constant dense<0.000000e+00> : vector<8x4xf32>
    %13 = tpu.matmul %12, %5, %cst_14 {dimension_numbers = #tpu.dot_dimension_numbers<[1], [0], [0], [1], [0, 0, 1, 1], [], []>} : vector<8x10xf32>, vector<10x4xf32>, vector<8x4xf32> -> vector<8x4xf32>
    %14 = vector.broadcast %6 : vector<1x4xf32> to vector<8x4xf32>
    %15 = arith.addf %13, %14 : vector<8x4xf32>
    %c0_15 = arith.constant 0 : index
    %c0_16 = arith.constant 0 : index
    %16 = vector.load %arg8[%c0_15, %c0_16] : memref<8x4xf32, #tpu.memory_space<vmem>>, vector<8x4xf32>
    tpu.vector_store %arg8[%c0_15, %c0_16], %15 {strides = array<i32>} : memref<8x4xf32, #tpu.memory_space<vmem>>, vector<8x4xf32>,
    return
  }
  func.func @transform_0(%arg0: i32) -> (i32, i32) {
    %c0_i32 = arith.constant 0 : i32
    %c0_i32_0 = arith.constant 0 : i32
    return %arg0, %c0_i32 : i32, i32
  }
  func.func @transform_1(%arg0: i32) -> (i32, i32) {
    %c0_i32 = arith.constant 0 : i32
    %c0_i32_0 = arith.constant 0 : i32
    %c0_i32_1 = arith.constant 0 : i32
    return %c0_i32, %c0_i32_0 : i32, i32
  }
  func.func @transform_2(%arg0: i32) -> (i32, i32) {
    %c0_i32 = arith.constant 0 : i32
    %c0_i32_0 = arith.constant 0 : i32
    %c0_i32_1 = arith.constant 0 : i32
    return %c0_i32, %c0_i32_0 : i32, i32
  }
  func.func @transform_3(%arg0: i32) -> (i32, i32) {
    %c0_i32 = arith.constant 0 : i32
    %c0_i32_0 = arith.constant 0 : i32
    %c0_i32_1 = arith.constant 0 : i32
    return %c0_i32, %c0_i32_0 : i32, i32
  }
  func.func @transform_4(%arg0: i32) -> (i32, i32) {
    %c0_i32 = arith.constant 0 : i32
    %c0_i32_0 = arith.constant 0 : i32
    %c0_i32_1 = arith.constant 0 : i32
    return %c0_i32, %c0_i32_0 : i32, i32
  }
  func.func @transform_5(%arg0: i32) -> (i32, i32) {
    %c0_i32 = arith.constant 0 : i32
    %c0_i32_0 = arith.constant 0 : i32
    %c0_i32_1 = arith.constant 0 : i32
    return %c0_i32, %c0_i32_0 : i32, i32
  }
  func.func @transform_6(%arg0: i32) -> (i32, i32) {
    %c0_i32 = arith.constant 0 : i32
    %c0_i32_0 = arith.constant 0 : i32
    %c0_i32_1 = arith.constant 0 : i32
    return %c0_i32, %c0_i32_0 : i32, i32
  }
  func.func @transform_7(%arg0: i32) -> (i32, i32) {
    %c0_i32 = arith.constant 0 : i32
    %c0_i32_0 = arith.constant 0 : i32
    return %arg0, %c0_i32 : i32, i32
  }
}

</mosaic_0001>

<llo_original>
// kernel: tpu_custom_call.1
$region0: #{tpu_custom_call.1}
  #allocation0 [shape = 'u32[]', space=smem, size = 0x4, offset = 0x4, fixed_abs, tag = 'smem constant byte address 0x4 - core index']
  #allocation1 [shape = 'u32[144,128]{1,0:T(1,128)}', space=vmem, size = 0x12000, scoped, tag = 'internal scratch']
  %s0 = inlined_call_operand.vmem [shape: f32[8,32], index: 0, kind: input, shape index: {}]
  %s1 = inlined_call_operand.vmem [shape: f32[32,20], index: 1, kind: input, shape index: {}]
  %s2 = inlined_call_operand.vmem [shape: f32[1,20], index: 2, kind: input, shape index: {}]
  %s3 = inlined_call_operand.vmem [shape: f32[20,10], index: 3, kind: input, shape index: {}]
  %s4 = inlined_call_operand.vmem [shape: f32[1,10], index: 4, kind: input, shape index: {}]
  %s5 = inlined_call_operand.vmem [shape: f32[10,4], index: 5, kind: input, shape index: {}]
  %s6 = inlined_call_operand.vmem [shape: f32[1,4], index: 6, kind: input, shape index: {}]
  %s7 = inlined_call_operand.vmem [shape: f32[8,4], index: 7, kind: output, shape index: {}]
  %s8 = sld [smem:[#allocation0]]
  $region38: #{tpu_custom_call.1} parent=0
    _
  %s10 = ssub.s32 1, %s8
  %s11 = scalar_select 0, %s10, %s8
  // Predicated region
  $region2: #{tpu_custom_call.1} parent=0 // pred_check
    _
  $region3: #{tpu_custom_call.1} parent=0 // pred_check_branch
    %13 = sbr.rel (0) target = $region5
  $region4: #{tpu_custom_call.1} parent=0 // pred_region
    _
  $region5: #{tpu_custom_call.1} parent=0 // pred_fallthru
    _
  // Predicated region
  $region6: #{tpu_custom_call.1} parent=0 // pred_check
    _
  $region7: #{tpu_custom_call.1} parent=0 // pred_check_branch
    %15 = sbr.rel (0) target = $region9
  $region8: #{tpu_custom_call.1} parent=0 // pred_region
    _
  $region9: #{tpu_custom_call.1} parent=0 // pred_fallthru
    _
  // Predicated region
  $region10: #{tpu_custom_call.1} parent=0 // pred_check
    _
  $region11: #{tpu_custom_call.1} parent=0 // pred_check_branch
    %17 = sbr.rel (0) target = $region13
  $region12: #{tpu_custom_call.1} parent=0 // pred_region
    _
  $region13: #{tpu_custom_call.1} parent=0 // pred_fallthru
    _
  // Predicated region
  $region14: #{tpu_custom_call.1} parent=0 // pred_check
    _
  $region15: #{tpu_custom_call.1} parent=0 // pred_check_branch
    %19 = sbr.rel (0) target = $region17
  $region16: #{tpu_custom_call.1} parent=0 // pred_region
    _
  $region17: #{tpu_custom_call.1} parent=0 // pred_fallthru
    _
  // Predicated region
  $region18: #{tpu_custom_call.1} parent=0 // pred_check
    _
  $region19: #{tpu_custom_call.1} parent=0 // pred_check_branch
    %21 = sbr.rel (0) target = $region21
  $region20: #{tpu_custom_call.1} parent=0 // pred_region
    _
  $region21: #{tpu_custom_call.1} parent=0 // pred_fallthru
    _
  // Predicated region
  $region22: #{tpu_custom_call.1} parent=0 // pred_check
    _
  $region23: #{tpu_custom_call.1} parent=0 // pred_check_branch
    %23 = sbr.rel (0) target = $region25
  $region24: #{tpu_custom_call.1} parent=0 // pred_region
    _
  $region25: #{tpu_custom_call.1} parent=0 // pred_fallthru
    _
  // Predicated region
  $region26: #{tpu_custom_call.1} parent=0 // pred_check
    _
  $region27: #{tpu_custom_call.1} parent=0 // pred_check_branch
    %25 = sbr.rel (0) target = $region29
  $region28: #{tpu_custom_call.1} parent=0 // pred_region
    _
  $region29: #{tpu_custom_call.1} parent=0 // pred_fallthru
    _
  %v26 = vld [vmem:[%s0] sm:$0xff]
  %v27 = vld [vmem:[%s1] sm:$0xff]
  %v28 = vld [vmem:[%s1 + $0x8] sm:$0xff]
  %v29 = vld [vmem:[%s1 + $0x10] sm:$0xff]
  %v30 = vld [vmem:[%s1 + $0x18] sm:$0xff]
  %v31 = vld [vmem:[%s2] sm:$0x1]
  %v32 = vld [vmem:[%s3] sm:$0xff]
  %v33 = vld [vmem:[%s3 + $0x8] sm:$0xff]
  %v34 = vld [vmem:[%s3 + $0x10] sm:$0xf]
  %v35 = vld [vmem:[%s4] sm:$0x1]
  %v36 = vld [vmem:[%s5] sm:$0xff]
  %v37 = vld [vmem:[%s5 + $0x8] sm:$0x3]
  %v38 = vld [vmem:[%s6] sm:$0x1]
  %v40 = vlaneseq
  %v41 = vshrl.u32 %v40, 7
  %v42 = vsub.s32 0, %v41
  %v43 = vrot.slane %v31, %v42
  %vm45 = vcmask 261120
  %v47 = vsel %vm45, %v26, 0
  %49 = vmatprep.subr.mxu0 0.0
  %50 = vmatpush1.msra.mxu0 0.0
  %51 = vmatprep.subr.mxu0 0.0
  %52 = vmatpush1.msra.mxu0 0.0
  %53 = vmatprep.subr.mxu0 0.0
  %54 = vmatpush1.msra.mxu0 0.0
  %55 = vmatprep.subr.mxu0 0.0
  %56 = vmatpush1.msra.mxu0 0.0
  %57 = vmatprep.subr.mxu0 0.0
  %58 = vmatpush1.msra.mxu0 0.0
  %59 = vmatprep.subr.mxu0 0.0
  %60 = vmatpush1.msra.mxu0 0.0
  %61 = vmatprep.subr.mxu0 0.0
  %62 = vmatpush1.msra.mxu0 0.0
  %63 = vmatprep.subr.mxu0 0.0
  %64 = vmatpush1.msra.mxu0 0.0
  %65 = vmatprep.subr.mxu0 0.0
  %66 = vmatpush1.msra.mxu0 0.0
  %67 = vmatprep.subr.mxu0 0.0
  %68 = vmatpush1.msra.mxu0 0.0
  %69 = vmatprep.subr.mxu0 0.0
  %70 = vmatpush1.msra.mxu0 0.0
  %71 = vmatprep.subr.mxu0 0.0
  %72 = vmatpush1.msra.mxu0 0.0
  %73 = vmatprep.subr.mxu0 0.0
  %74 = vmatpush1.msra.mxu0 %v30
  %75 = vmatprep.subr.mxu0 0.0
  %76 = vmatpush1.msra.mxu0 %v29
  %77 = vmatprep.subr.mxu0 0.0
  %78 = vmatpush1.msra.mxu0 %v28
  %79 = vmatprep.subr.mxu0 0.0
  %80 = vmatpush1.msra.mxu0 %v27
  %81 = vmatprep.subr.mxu0 0.0
  %82 = vmatpush2.msra.mxu0 0.0
  %83 = vmatprep.subr.mxu0 0.0
  %84 = vmatpush2.msra.mxu0 0.0
  %85 = vmatprep.subr.mxu0 0.0
  %86 = vmatpush2.msra.mxu0 0.0
  %87 = vmatprep.subr.mxu0 0.0
  %88 = vmatpush2.msra.mxu0 0.0
  %89 = vmatprep.subr.mxu0 0.0
  %90 = vmatpush2.msra.mxu0 0.0
  %91 = vmatprep.subr.mxu0 0.0
  %92 = vmatpush2.msra.mxu0 0.0
  %93 = vmatprep.subr.mxu0 0.0
  %94 = vmatpush2.msra.mxu0 0.0
  %95 = vmatprep.subr.mxu0 0.0
  %96 = vmatpush2.msra.mxu0 0.0
  %97 = vmatprep.subr.mxu0 0.0
  %98 = vmatpush2.msra.mxu0 0.0
  %99 = vmatprep.subr.mxu0 0.0
  %100 = vmatpush2.msra.mxu0 0.0
  %101 = vmatprep.subr.mxu0 0.0
  %102 = vmatpush2.msra.mxu0 0.0
  %103 = vmatprep.subr.mxu0 0.0
  %104 = vmatpush2.msra.mxu0 0.0
  %105 = vmatprep.subr.mxu0 0.0
  %106 = vmatpush2.msra.mxu0 0.0
  %107 = vmatprep.subr.mxu0 0.0
  %108 = vmatpush2.msra.mxu0 0.0
  %109 = vmatprep.subr.mxu0 0.0
  %110 = vmatpush2.msra.mxu0 0.0
  %111 = vmatprep.subr.mxu0 0.0
  %112 = vmatpush2.msra.mxu0 0.0
  %113 = vmatprep.mubr.f32.mxu0 0.0
  %114 = vmatmul.mubr.f32.gmra.mxu0 %v47
  %v115 = vpop.f32.mrf.mxu0
  %v116 = vadd.f32 %v43, %v115
  %v117 = vpop.f32.mrf.mxu0
  %118 = vdwg.mxu0
  %v120 = vlaneseq
  %v121 = vshrl.u32 %v120, 7
  %v122 = vsub.s32 0, %v121
  %v123 = vrot.slane %v35, %v122
  %vm125 = vcmask 162816
  %v127 = vsel %vm125, %v116, 0
  %vm129 = vcmask 1043456
  %v131 = vsel %vm129, %v34, 0
  %133 = vmatprep.subr.mxu0 0.0
  %134 = vmatpush1.msra.mxu0 0.0
  %135 = vmatprep.subr.mxu0 0.0
  %136 = vmatpush1.msra.mxu0 0.0
  %137 = vmatprep.subr.mxu0 0.0
  %138 = vmatpush1.msra.mxu0 0.0
  %139 = vmatprep.subr.mxu0 0.0
  %140 = vmatpush1.msra.mxu0 0.0
  %141 = vmatprep.subr.mxu0 0.0
  %142 = vmatpush1.msra.mxu0 0.0
  %143 = vmatprep.subr.mxu0 0.0
  %144 = vmatpush1.msra.mxu0 0.0
  %145 = vmatprep.subr.mxu0 0.0
  %146 = vmatpush1.msra.mxu0 0.0
  %147 = vmatprep.subr.mxu0 0.0
  %148 = vmatpush1.msra.mxu0 0.0
  %149 = vmatprep.subr.mxu0 0.0
  %150 = vmatpush1.msra.mxu0 0.0
  %151 = vmatprep.subr.mxu0 0.0
  %152 = vmatpush1.msra.mxu0 0.0
  %153 = vmatprep.subr.mxu0 0.0
  %154 = vmatpush1.msra.mxu0 0.0
  %155 = vmatprep.subr.mxu0 0.0
  %156 = vmatpush1.msra.mxu0 0.0
  %157 = vmatprep.subr.mxu0 0.0
  %158 = vmatpush1.msra.mxu0 0.0
  %159 = vmatprep.subr.mxu0 0.0
  %160 = vmatpush1.msra.mxu0 %v131
  %161 = vmatprep.subr.mxu0 0.0
  %162 = vmatpush1.msra.mxu0 %v33
  %163 = vmatprep.subr.mxu0 0.0
  %164 = vmatpush1.msra.mxu0 %v32
  %165 = vmatprep.subr.mxu0 0.0
  %166 = vmatpush2.msra.mxu0 0.0
  %167 = vmatprep.subr.mxu0 0.0
  %168 = vmatpush2.msra.mxu0 0.0
  %169 = vmatprep.subr.mxu0 0.0
  %170 = vmatpush2.msra.mxu0 0.0
  %171 = vmatprep.subr.mxu0 0.0
  %172 = vmatpush2.msra.mxu0 0.0
  %173 = vmatprep.subr.mxu0 0.0
  %174 = vmatpush2.msra.mxu0 0.0
  %175 = vmatprep.subr.mxu0 0.0
  %176 = vmatpush2.msra.mxu0 0.0
  %177 = vmatprep.subr.mxu0 0.0
  %178 = vmatpush2.msra.mxu0 0.0
  %179 = vmatprep.subr.mxu0 0.0
  %180 = vmatpush2.msra.mxu0 0.0
  %181 = vmatprep.subr.mxu0 0.0
  %182 = vmatpush2.msra.mxu0 0.0
  %183 = vmatprep.subr.mxu0 0.0
  %184 = vmatpush2.msra.mxu0 0.0
  %185 = vmatprep.subr.mxu0 0.0
  %186 = vmatpush2.msra.mxu0 0.0
  %187 = vmatprep.subr.mxu0 0.0
  %188 = vmatpush2.msra.mxu0 0.0
  %189 = vmatprep.subr.mxu0 0.0
  %190 = vmatpush2.msra.mxu0 0.0
  %191 = vmatprep.subr.mxu0 0.0
  %192 = vmatpush2.msra.mxu0 0.0
  %193 = vmatprep.subr.mxu0 0.0
  %194 = vmatpush2.msra.mxu0 0.0
  %195 = vmatprep.subr.mxu0 0.0
  %196 = vmatpush2.msra.mxu0 0.0
  %197 = vmatprep.mubr.f32.mxu0 0.0
  %198 = vmatmul.mubr.f32.gmra.mxu0 %v127
  %v199 = vpop.f32.mrf.mxu0
  %v200 = vadd.f32 %v123, %v199
  %v201 = vpop.f32.mrf.mxu0
  %202 = vdwg.mxu0
  %v204 = vlaneseq
  %v205 = vshrl.u32 %v204, 7
  %v206 = vsub.s32 0, %v205
  %v207 = vrot.slane %v38, %v206
  %vm209 = vcmask 80896
  %v211 = vsel %vm209, %v200, 0
  %vm213 = vcmask 1041408
  %v215 = vsel %vm213, %v37, 0
  %217 = vmatprep.subr.mxu0 0.0
  %218 = vmatpush1.msra.mxu0 0.0
  %219 = vmatprep.subr.mxu0 0.0
  %220 = vmatpush1.msra.mxu0 0.0
  %221 = vmatprep.subr.mxu0 0.0
  %222 = vmatpush1.msra.mxu0 0.0
  %223 = vmatprep.subr.mxu0 0.0
  %224 = vmatpush1.msra.mxu0 0.0
  %225 = vmatprep.subr.mxu0 0.0
  %226 = vmatpush1.msra.mxu0 0.0
  %227 = vmatprep.subr.mxu0 0.0
  %228 = vmatpush1.msra.mxu0 0.0
  %229 = vmatprep.subr.mxu0 0.0
  %230 = vmatpush1.msra.mxu0 0.0
  %231 = vmatprep.subr.mxu0 0.0
  %232 = vmatpush1.msra.mxu0 0.0
  %233 = vmatprep.subr.mxu0 0.0
  %234 = vmatpush1.msra.mxu0 0.0
  %235 = vmatprep.subr.mxu0 0.0
  %236 = vmatpush1.msra.mxu0 0.0
  %237 = vmatprep.subr.mxu0 0.0
  %238 = vmatpush1.msra.mxu0 0.0
  %239 = vmatprep.subr.mxu0 0.0
  %240 = vmatpush1.msra.mxu0 0.0
  %241 = vmatprep.subr.mxu0 0.0
  %242 = vmatpush1.msra.mxu0 0.0
  %243 = vmatprep.subr.mxu0 0.0
  %244 = vmatpush1.msra.mxu0 0.0
  %245 = vmatprep.subr.mxu0 0.0
  %246 = vmatpush1.msra.mxu0 %v215
  %247 = vmatprep.subr.mxu0 0.0
  %248 = vmatpush1.msra.mxu0 %v36
  %249 = vmatprep.subr.mxu0 0.0
  %250 = vmatpush2.msra.mxu0 0.0
  %251 = vmatprep.subr.mxu0 0.0
  %252 = vmatpush2.msra.mxu0 0.0
  %253 = vmatprep.subr.mxu0 0.0
  %254 = vmatpush2.msra.mxu0 0.0
  %255 = vmatprep.subr.mxu0 0.0
  %256 = vmatpush2.msra.mxu0 0.0
  %257 = vmatprep.subr.mxu0 0.0
  %258 = vmatpush2.msra.mxu0 0.0
  %259 = vmatprep.subr.mxu0 0.0
  %260 = vmatpush2.msra.mxu0 0.0
  %261 = vmatprep.subr.mxu0 0.0
  %262 = vmatpush2.msra.mxu0 0.0
  %263 = vmatprep.subr.mxu0 0.0
  %264 = vmatpush2.msra.mxu0 0.0
  %265 = vmatprep.subr.mxu0 0.0
  %266 = vmatpush2.msra.mxu0 0.0
  %267 = vmatprep.subr.mxu0 0.0
  %268 = vmatpush2.msra.mxu0 0.0
  %269 = vmatprep.subr.mxu0 0.0
  %270 = vmatpush2.msra.mxu0 0.0
  %271 = vmatprep.subr.mxu0 0.0
  %272 = vmatpush2.msra.mxu0 0.0
  %273 = vmatprep.subr.mxu0 0.0
  %274 = vmatpush2.msra.mxu0 0.0
  %275 = vmatprep.subr.mxu0 0.0
  %276 = vmatpush2.msra.mxu0 0.0
  %277 = vmatprep.subr.mxu0 0.0
  %278 = vmatpush2.msra.mxu0 0.0
  %279 = vmatprep.subr.mxu0 0.0
  %280 = vmatpush2.msra.mxu0 0.0
  %281 = vmatprep.mubr.f32.mxu0 0.0
  %282 = vmatmul.mubr.f32.gmra.mxu0 %v211
  %v283 = vpop.f32.mrf.mxu0
  %v284 = vadd.f32 %v207, %v283
  %v285 = vpop.f32.mrf.mxu0
  %286 = vdwg.mxu0
  %vm287 = vcmask 31744
  %288 = vst.msk [vmem:[%s7] sm:$0xff] %vm287, %v284
  // Predicated region
  $region30: #{tpu_custom_call.1} parent=0 // pred_check
    _
  $region31: #{tpu_custom_call.1} parent=0 // pred_check_branch
    %290 = sbr.rel (0) target = $region33
  $region32: #{tpu_custom_call.1} parent=0 // pred_region
    _
  $region33: #{tpu_custom_call.1} parent=0 // pred_fallthru
    _
  // Predicated region
  $region34: #{tpu_custom_call.1} parent=0 // pred_check
    _
  $region35: #{tpu_custom_call.1} parent=0 // pred_check_branch
    %292 = sbr.rel (0) target = $region37
  $region36: #{tpu_custom_call.1} parent=0 // pred_region
    _
  $region37: #{tpu_custom_call.1} parent=0 // pred_fallthru
    _

</llo_original>
